<compile_context>
chip_gen: v6e
topology: v6e:2x2x1
jax: 0.10.0
libtpu: 0.0.40
codegen_flags: <defaults>
</compile_context>

<pallas_src>
import jax
import jax.numpy as jnp
from jax.experimental import pallas as pl
from jax.experimental.pallas import tpu as pltpu


# ---------------------------------------------------------------------------
# Fused self-attention kernel (one batch row per grid step)
# ---------------------------------------------------------------------------
def self_attention_kernel(x_ref, qv_ref, qg_ref, kv_ref, kg_ref,
                          vv_ref, vg_ref, gamma_ref, o_ref):
    # x_ref     : (1, C, N)   channels-first activation slab (one batch row)
    # qv/qg     : (Cq, C), (Cq, 1)   weight_norm v / g for the query conv
    # kv/kg     : (Cq, C), (Cq, 1)   ... key conv
    # vv/vg     : (C,  C), (C,  1)   ... value conv
    # gamma_ref : (1, 1)
    # o_ref     : (1, C, N)
    x = x_ref[0]                                     # (C, N)

    def weight_norm(v_ref, g_ref):
        v = v_ref[...]                               # (Co, C)
        g = g_ref[...]                               # (Co, 1)
        inv_norm = jax.lax.rsqrt(jnp.sum(v * v, axis=1, keepdims=True))
        return v * (g * inv_norm)                    # (Co, C)

    wq = weight_norm(qv_ref, qg_ref)                 # (Cq, C)
    wk = weight_norm(kv_ref, kg_ref)                 # (Cq, C)
    wv = weight_norm(vv_ref, vg_ref)                 # (C,  C)

    # 1x1 conv projections: (Co, C) @ (C, N) -> (Co, N); N on the lane axis.
    f = jnp.dot(wq, x, preferred_element_type=jnp.float32)     # (Cq, N)
    g = jnp.dot(wk, x, preferred_element_type=jnp.float32)     # (Cq, N)
    h = jnp.dot(wv, x, preferred_element_type=jnp.float32)     # (C,  N)

    # S[i, j] = sum_c f[c, i] * g[c, j]  == bmm(f^T, g) for this batch row.
    s = jnp.dot(f.T, g, preferred_element_type=jnp.float32)    # (N, N)

    # softmax over dim=1 of the (B, N, N) torch tensor == over axis 0 here.
    s = s - jnp.max(s, axis=0, keepdims=True)
    p = jnp.exp(s)
    beta = p / jnp.sum(p, axis=0, keepdims=True)                # (N, N)

    # o = gamma * (h @ beta) + x   -- contraction over N (MXU-friendly).
    o_att = jnp.dot(h, beta, preferred_element_type=jnp.float32)  # (C, N)
    o_ref[0] = gamma_ref[...] * o_att + x


def self_attention(x, params):
    """x: (B, C, *spatial) float32 -> same shape. Mirrors SelfAttention.forward."""
    size = x.shape
    B, C = size[0], size[1]
    xf = x.reshape(B, C, -1)                         # torch .view(*size[:2], -1)
    N = xf.shape[-1]
    Cq = params["q_v"].shape[0]

    out = pl.pallas_call(
        self_attention_kernel,
        out_shape=jax.ShapeDtypeStruct((B, C, N), jnp.float32),
        grid=(B,),
        in_specs=[
            pl.BlockSpec((1, C, N), lambda b: (b, 0, 0)),   # x (per-batch slab)
            pl.BlockSpec((Cq, C), lambda b: (0, 0)),        # q_v (resident)
            pl.BlockSpec((Cq, 1), lambda b: (0, 0)),        # q_g
            pl.BlockSpec((Cq, C), lambda b: (0, 0)),        # k_v
            pl.BlockSpec((Cq, 1), lambda b: (0, 0)),        # k_g
            pl.BlockSpec((C, C), lambda b: (0, 0)),         # v_v
            pl.BlockSpec((C, 1), lambda b: (0, 0)),         # v_g
            pl.BlockSpec((1, 1), lambda b: (0, 0)),         # gamma
        ],
        out_specs=pl.BlockSpec((1, C, N), lambda b: (b, 0, 0)),
        compiler_params=pltpu.CompilerParams(
            dimension_semantics=("parallel",)),
    )(xf, params["q_v"], params["q_g"], params["k_v"], params["k_g"],
      params["v_v"], params["v_g"], params["gamma"])

    return out.reshape(size)                          # torch .view(*size)


# ---------------------------------------------------------------------------
# Pure-JAX reference (same math, HIGHEST precision matmuls)
# ---------------------------------------------------------------------------
def self_attention_ref(x, params):
    size = x.shape
    B, C = size[0], size[1]
    xf = x.reshape(B, C, -1)
    hi = jax.lax.Precision.HIGHEST

    def weight_norm(v, g):
        return v * (g / jnp.sqrt(jnp.sum(v * v, axis=1, keepdims=True)))

    wq = weight_norm(params["q_v"], params["q_g"])
    wk = weight_norm(params["k_v"], params["k_g"])
    wv = weight_norm(params["v_v"], params["v_g"])

    f = jnp.einsum("oc,bcn->bon", wq, xf, precision=hi)
    g = jnp.einsum("oc,bcn->bon", wk, xf, precision=hi)
    h = jnp.einsum("oc,bcn->bon", wv, xf, precision=hi)

    s = jnp.einsum("bci,bcj->bij", f, g, precision=hi)      # bmm(f^T, g)
    beta = jax.nn.softmax(s, axis=1)                        # dim=1
    o = params["gamma"][0, 0] * jnp.einsum("bci,bij->bcj", h, beta,
                                           precision=hi) + xf
    return o.reshape(size)


def make_params(key, n_channels):
    cq = n_channels // 8
    k1, k2, k3, k4, k5, k6 = jax.random.split(key, 6)
    q_v = 0.1 * jax.random.normal(k1, (cq, n_channels), jnp.float32)
    q_g = 1.0 + 0.1 * jax.random.normal(k2, (cq, 1), jnp.float32)
    k_v = 0.1 * jax.random.normal(k3, (cq, n_channels), jnp.float32)
    k_g = 1.0 + 0.1 * jax.random.normal(k4, (cq, 1), jnp.float32)
    v_v = 0.1 * jax.random.normal(k5, (n_channels, n_channels), jnp.float32)
    v_g = 1.0 + 0.1 * jax.random.normal(k6, (n_channels, 1), jnp.float32)
    # torch initializes gamma to 0.0 (output == x); use 0.5 here so the
    # attention path is actually exercised by the numerical check.
    gamma = jnp.full((1, 1), 0.5, jnp.float32)
    return dict(q_v=q_v, q_g=q_g, k_v=k_v, k_g=k_g,
                v_v=v_v, v_g=v_g, gamma=gamma)


if __name__ == "__main__":
    B, C, L = 2, 64, 128          # batch, n_channels, flattened spatial/seq (N)

    key = jax.random.PRNGKey(0)
    kx, kp = jax.random.split(key)
    x = jax.random.normal(kx, (B, C, L), jnp.float32)
    params = make_params(kp, C)

    out = self_attention(x, params)
    out = jax.block_until_ready(out)

    ref = self_attention_ref(x, params)
    assert out.shape == x.shape
    # generous tolerance covers any MXU f32-emulation rounding differences
    assert jnp.allclose(out, ref, atol=2e-3, rtol=2e-3), (
        float(jnp.max(jnp.abs(out - ref))))

    print("KERNEL_OK")
</pallas_src>

<mosaic_0001>
module attributes {stable_mosaic.version = 11 : i64} {
  func.func @self_attention_kernel(%arg0: i32, %arg1: memref<1x64x128xf32, #tpu.memory_space<vmem>>, %arg2: memref<8x64xf32, #tpu.memory_space<vmem>>, %arg3: memref<8x1xf32, #tpu.memory_space<vmem>>, %arg4: memref<8x64xf32, #tpu.memory_space<vmem>>, %arg5: memref<8x1xf32, #tpu.memory_space<vmem>>, %arg6: memref<64x64xf32, #tpu.memory_space<vmem>>, %arg7: memref<64x1xf32, #tpu.memory_space<vmem>>, %arg8: memref<1x1xf32, #tpu.memory_space<vmem>>, %arg9: memref<1x64x128xf32, #tpu.memory_space<vmem>>) attributes {dimension_semantics = [#tpu.dimension_semantics<parallel>], iteration_bounds = array<i64: 2>, scalar_prefetch = 0 : i64, scratch_operands = 0 : i64, tpu.core_type = #tpu.core_type<tc>, window_params = [{transform_indices = @transform_0, window_bounds = array<i64: 1, 64, 128>}, {pipeline_mode = #tpu.pipeline_mode<synchronous>, transform_indices = @transform_1, window_bounds = array<i64: 8, 64>}, {pipeline_mode = #tpu.pipeline_mode<synchronous>, transform_indices = @transform_2, window_bounds = array<i64: 8, 1>}, {pipeline_mode = #tpu.pipeline_mode<synchronous>, transform_indices = @transform_3, window_bounds = array<i64: 8, 64>}, {pipeline_mode = #tpu.pipeline_mode<synchronous>, transform_indices = @transform_4, window_bounds = array<i64: 8, 1>}, {pipeline_mode = #tpu.pipeline_mode<synchronous>, transform_indices = @transform_5, window_bounds = array<i64: 64, 64>}, {pipeline_mode = #tpu.pipeline_mode<synchronous>, transform_indices = @transform_6, window_bounds = array<i64: 64, 1>}, {pipeline_mode = #tpu.pipeline_mode<synchronous>, transform_indices = @transform_7, window_bounds = array<i64: 1, 1>}, {transform_indices = @transform_8, window_bounds = array<i64: 1, 64, 128>}]} {
    %c0 = arith.constant 0 : index
    %c0_0 = arith.constant 0 : index
    %c0_1 = arith.constant 0 : index
    %0 = vector.load %arg1[%c0, %c0_0, %c0_1] : memref<1x64x128xf32, #tpu.memory_space<vmem>>, vector<1x64x128xf32>
    %1 = vector.shape_cast %0 : vector<1x64x128xf32> to vector<64x128xf32>
    %c0_2 = arith.constant 0 : index
    %c0_3 = arith.constant 0 : index
    %2 = vector.load %arg2[%c0_2, %c0_3] : memref<8x64xf32, #tpu.memory_space<vmem>>, vector<8x64xf32>
    %c0_4 = arith.constant 0 : index
    %c0_5 = arith.constant 0 : index
    %3 = vector.load %arg3[%c0_4, %c0_5] : memref<8x1xf32, #tpu.memory_space<vmem>>, vector<8x1xf32>
    %4 = arith.mulf %2, %2 : vector<8x64xf32>
    %cst = arith.constant dense<0.000000e+00> : vector<8xf32>
    %5 = vector.multi_reduction <add>, %4, %cst [1] : vector<8x64xf32> to vector<8xf32>
    %6 = vector.shape_cast %5 : vector<8xf32> to vector<8x1xf32>
    %7 = math.rsqrt %6 : vector<8x1xf32>
    %8 = arith.mulf %3, %7 : vector<8x1xf32>
    %9 = vector.broadcast %8 : vector<8x1xf32> to vector<8x64xf32>
    %10 = arith.mulf %2, %9 : vector<8x64xf32>
    %c0_6 = arith.constant 0 : index
    %c0_7 = arith.constant 0 : index
    %11 = vector.load %arg4[%c0_6, %c0_7] : memref<8x64xf32, #tpu.memory_space<vmem>>, vector<8x64xf32>
    %c0_8 = arith.constant 0 : index
    %c0_9 = arith.constant 0 : index
    %12 = vector.load %arg5[%c0_8, %c0_9] : memref<8x1xf32, #tpu.memory_space<vmem>>, vector<8x1xf32>
    %13 = arith.mulf %11, %11 : vector<8x64xf32>
    %cst_10 = arith.constant dense<0.000000e+00> : vector<8xf32>
    %14 = vector.multi_reduction <add>, %13, %cst_10 [1] : vector<8x64xf32> to vector<8xf32>
    %15 = vector.shape_cast %14 : vector<8xf32> to vector<8x1xf32>
    %16 = math.rsqrt %15 : vector<8x1xf32>
    %17 = arith.mulf %12, %16 : vector<8x1xf32>
    %18 = vector.broadcast %17 : vector<8x1xf32> to vector<8x64xf32>
    %19 = arith.mulf %11, %18 : vector<8x64xf32>
    %c0_11 = arith.constant 0 : index
    %c0_12 = arith.constant 0 : index
    %20 = vector.load %arg6[%c0_11, %c0_12] : memref<64x64xf32, #tpu.memory_space<vmem>>, vector<64x64xf32>
    %c0_13 = arith.constant 0 : index
    %c0_14 = arith.constant 0 : index
    %21 = vector.load %arg7[%c0_13, %c0_14] : memref<64x1xf32, #tpu.memory_space<vmem>>, vector<64x1xf32>
    %22 = arith.mulf %20, %20 : vector<64x64xf32>
    %cst_15 = arith.constant dense<0.000000e+00> : vector<64xf32>
    %23 = vector.multi_reduction <add>, %22, %cst_15 [1] : vector<64x64xf32> to vector<64xf32>
    %24 = vector.shape_cast %23 : vector<64xf32> to vector<64x1xf32>
    %25 = math.rsqrt %24 : vector<64x1xf32>
    %26 = arith.mulf %21, %25 : vector<64x1xf32>
    %27 = vector.broadcast %26 : vector<64x1xf32> to vector<64x64xf32>
    %28 = arith.mulf %20, %27 : vector<64x64xf32>
    %cst_16 = arith.constant dense<0.000000e+00> : vector<8x128xf32>
    %29 = tpu.matmul %10, %1, %cst_16 {dimension_numbers = #tpu.dot_dimension_numbers<[1], [0], [0], [1], [0, 0, 1, 1], [], []>} : vector<8x64xf32>, vector<64x128xf32>, vector<8x128xf32> -> vector<8x128xf32>
    %cst_17 = arith.constant dense<0.000000e+00> : vector<8x128xf32>
    %30 = tpu.matmul %19, %1, %cst_17 {dimension_numbers = #tpu.dot_dimension_numbers<[1], [0], [0], [1], [0, 0, 1, 1], [], []>} : vector<8x64xf32>, vector<64x128xf32>, vector<8x128xf32> -> vector<8x128xf32>
    %cst_18 = arith.constant dense<0.000000e+00> : vector<64x128xf32>
    %31 = tpu.matmul %28, %1, %cst_18 {dimension_numbers = #tpu.dot_dimension_numbers<[1], [0], [0], [1], [0, 0, 1, 1], [], []>} : vector<64x64xf32>, vector<64x128xf32>, vector<64x128xf32> -> vector<64x128xf32>
    %32 = tpu.transpose %29, [1, 0] : vector<8x128xf32> -> vector<128x8xf32>
    %cst_19 = arith.constant dense<0.000000e+00> : vector<128x128xf32>
    %33 = tpu.matmul %32, %30, %cst_19 {dimension_numbers = #tpu.dot_dimension_numbers<[1], [0], [0], [1], [0, 0, 1, 1], [], []>} : vector<128x8xf32>, vector<8x128xf32>, vector<128x128xf32> -> vector<128x128xf32>
    %cst_20 = arith.constant dense<0xFF800000> : vector<128xf32>
    %34 = vector.multi_reduction <maximumf>, %33, %cst_20 [0] : vector<128x128xf32> to vector<128xf32>
    %35 = vector.shape_cast %34 : vector<128xf32> to vector<1x128xf32>
    %36 = vector.broadcast %35 : vector<1x128xf32> to vector<128x128xf32>
    %37 = arith.subf %33, %36 : vector<128x128xf32>
    %38 = math.exp %37 : vector<128x128xf32>
    %cst_21 = arith.constant dense<0.000000e+00> : vector<128xf32>
    %39 = vector.multi_reduction <add>, %38, %cst_21 [0] : vector<128x128xf32> to vector<128xf32>
    %40 = vector.shape_cast %39 : vector<128xf32> to vector<1x128xf32>
    %41 = vector.broadcast %40 : vector<1x128xf32> to vector<128x128xf32>
    %42 = arith.divf %38, %41 : vector<128x128xf32>
    %cst_22 = arith.constant dense<0.000000e+00> : vector<64x128xf32>
    %43 = tpu.matmul %31, %42, %cst_22 {dimension_numbers = #tpu.dot_dimension_numbers<[1], [0], [0], [1], [0, 0, 1, 1], [], []>} : vector<64x128xf32>, vector<128x128xf32>, vector<64x128xf32> -> vector<64x128xf32>
    %c0_23 = arith.constant 0 : index
    %c0_24 = arith.constant 0 : index
    %44 = vector.load %arg8[%c0_23, %c0_24] : memref<1x1xf32, #tpu.memory_space<vmem>>, vector<1x1xf32>
    %45 = vector.broadcast %44 : vector<1x1xf32> to vector<64x128xf32>
    %46 = arith.mulf %45, %43 : vector<64x128xf32>
    %47 = arith.addf %46, %1 : vector<64x128xf32>
    %c0_25 = arith.constant 0 : index
    %c0_26 = arith.constant 0 : index
    %c0_27 = arith.constant 0 : index
    %48 = vector.load %arg9[%c0_25, %c0_26, %c0_27] : memref<1x64x128xf32, #tpu.memory_space<vmem>>, vector<1x64x128xf32>
    %49 = vector.shape_cast %48 : vector<1x64x128xf32> to vector<64x128xf32>
    %50 = vector.shape_cast %47 : vector<64x128xf32> to vector<1x64x128xf32>
    tpu.vector_store %arg9[%c0_25, %c0_26, %c0_27], %50 {strides = array<i32>} : memref<1x64x128xf32, #tpu.memory_space<vmem>>, vector<1x64x128xf32>,
    return
  }
  func.func @transform_0(%arg0: i32) -> (i32, i32, i32) {
    %c0_i32 = arith.constant 0 : i32
    %c0_i32_0 = arith.constant 0 : i32
    %c0_i32_1 = arith.constant 0 : i32
    return %arg0, %c0_i32, %c0_i32_0 : i32, i32, i32
  }
  func.func @transform_1(%arg0: i32) -> (i32, i32) {
    %c0_i32 = arith.constant 0 : i32
    %c0_i32_0 = arith.constant 0 : i32
    %c0_i32_1 = arith.constant 0 : i32
    return %c0_i32, %c0_i32_0 : i32, i32
  }
  func.func @transform_2(%arg0: i32) -> (i32, i32) {
    %c0_i32 = arith.constant 0 : i32
    %c0_i32_0 = arith.constant 0 : i32
    %c0_i32_1 = arith.constant 0 : i32
    return %c0_i32, %c0_i32_0 : i32, i32
  }
  func.func @transform_3(%arg0: i32) -> (i32, i32) {
    %c0_i32 = arith.constant 0 : i32
    %c0_i32_0 = arith.constant 0 : i32
    %c0_i32_1 = arith.constant 0 : i32
    return %c0_i32, %c0_i32_0 : i32, i32
  }
  func.func @transform_4(%arg0: i32) -> (i32, i32) {
    %c0_i32 = arith.constant 0 : i32
    %c0_i32_0 = arith.constant 0 : i32
    %c0_i32_1 = arith.constant 0 : i32
    return %c0_i32, %c0_i32_0 : i32, i32
  }
  func.func @transform_5(%arg0: i32) -> (i32, i32) {
    %c0_i32 = arith.constant 0 : i32
    %c0_i32_0 = arith.constant 0 : i32
    %c0_i32_1 = arith.constant 0 : i32
    return %c0_i32, %c0_i32_0 : i32, i32
  }
  func.func @transform_6(%arg0: i32) -> (i32, i32) {
    %c0_i32 = arith.constant 0 : i32
    %c0_i32_0 = arith.constant 0 : i32
    %c0_i32_1 = arith.constant 0 : i32
    return %c0_i32, %c0_i32_0 : i32, i32
  }
  func.func @transform_7(%arg0: i32) -> (i32, i32) {
    %c0_i32 = arith.constant 0 : i32
    %c0_i32_0 = arith.constant 0 : i32
    %c0_i32_1 = arith.constant 0 : i32
    return %c0_i32, %c0_i32_0 : i32, i32
  }
  func.func @transform_8(%arg0: i32) -> (i32, i32, i32) {
    %c0_i32 = arith.constant 0 : i32
    %c0_i32_0 = arith.constant 0 : i32
    %c0_i32_1 = arith.constant 0 : i32
    return %arg0, %c0_i32, %c0_i32_0 : i32, i32, i32
  }
}

</mosaic_0001>

<llo_original>
// kernel: tpu_custom_call.1
$region0: #{tpu_custom_call.1}
  #allocation0 [shape = 'u32[]', space=smem, size = 0x4, offset = 0x4, fixed_abs, tag = 'smem constant byte address 0x4 - core index']
  #allocation1 [shape = 'u32[144,128]{1,0:T(1,128)}', space=vmem, size = 0x12000, scoped, tag = 'internal scratch']
  #allocation2 [shape = 'f32[1,1]{1,0:T(1,128)S(1)}', space=vmem, size = 0x200, scoped, tag = 'scoped memory for tpu_custom_call.1']
  %s0 = inlined_call_operand.hbm [shape: f32[2,64,128], index: 0, kind: input, shape index: {}]
  %s1 = inlined_call_operand.vmem [shape: f32[8,64], index: 1, kind: input, shape index: {}]
  %s2 = inlined_call_operand.vmem [shape: f32[8,1], index: 2, kind: input, shape index: {}]
  %s3 = inlined_call_operand.vmem [shape: f32[8,64], index: 3, kind: input, shape index: {}]
  %s4 = inlined_call_operand.vmem [shape: f32[8,1], index: 4, kind: input, shape index: {}]
  %s5 = inlined_call_operand.vmem [shape: f32[64,64], index: 5, kind: input, shape index: {}]
  %s6 = inlined_call_operand.vmem [shape: f32[64,1], index: 6, kind: input, shape index: {}]
  %s7 = inlined_call_operand.<no memory space> [shape: f32[1,1], index: 7, kind: input, shape index: {}]
  %s8 = inlined_call_operand.hbm [shape: f32[2,64,128], index: 8, kind: output, shape index: {}]
  %s9 = sld [smem:[#allocation0]]
  $region69: #{tpu_custom_call.1} parent=0
    _
  %s11 = ssub.s32 1, %s9
  %s12 = scalar_select 0, %s11, %s9
  %v13 = vstv %s7
  %14 = vst [vmem:[#allocation2] sm:$0x1] %v13
  $region1: #{tpu_custom_call.1} parent=0
    #allocation3 [shape = 'u8[65536]{0}', space=vmem, size = 0x10000, scoped, tag = 'input window, operand 0']
    #allocation4 [shape = 's32[2]{0}', space=sflag, size = 0x8, scoped, tag = 'scoped memory for tpu_custom_call.1']
    #allocation5 [shape = 's32[2]{0}', space=sflag, size = 0x8, scoped, tag = 'scoped memory for tpu_custom_call.1']
    #allocation6 [shape = 'u8[65536]{0}', space=vmem, size = 0x10000, scoped, tag = 'output window, operand 0']
    %15 = vsyncpa [#allocation4], 0
    %s16 = scalar_lea.sflag [#allocation4], 1
    %17 = vsyncpa %s16, 0
    %18 = vsyncpa [#allocation5], 0
    %s19 = scalar_lea.sflag [#allocation5], 1
    %20 = vsyncpa %s19, 0
    loop: start=0, step=1, limit=4
    $region2: #{tpu_custom_call.1} parent=1 // loop_pre_header
      _
    $region3: #{tpu_custom_call.1} parent=1 // loop_header
      %s22 = sphi 0, %s26
      %p23 = scmp.ge.s32.totalorder %s22, 4
      %s32 = sphi 0, %s34
      %s35 = sphi 0, %s32
      %s36 = sphi 0, %s35
      %s52 = sphi 0, %s36
      %s56 = sphi 0, %s56
      %s58 = sphi 0, %s56
      %s59 = sphi 0, %s58
      %s73 = sphi 0, %s59
      %s77 = sphi 0, %s77
      %s79 = sphi 0, %s77
      %s80 = sphi 0, %s79
      %s94 = sphi 0, %s80
      %s98 = sphi 0, %s98
      %s100 = sphi 0, %s98
      %s101 = sphi 0, %s100
      %s115 = sphi 0, %s101
      %s119 = sphi 0, %s119
      %s121 = sphi 0, %s119
      %s122 = sphi 0, %s121
      %s136 = sphi 0, %s122
      %s140 = sphi 0, %s140
      %s142 = sphi 0, %s140
      %s143 = sphi 0, %s142
      %s157 = sphi 0, %s143
      %s161 = sphi 0, %s161
      %s163 = sphi 0, %s161
      %s164 = sphi 0, %s163
      %s178 = sphi 0, %s164
      %s182 = sphi 0, %s182
      %s184 = sphi 0, %s182
      %s185 = sphi 0, %s184
      %s199 = sphi 0, %s185
      %s205 = sphi 0, %s207
      %s208 = sphi 0, %s205
      %s209 = sphi 0, %s208
      %s225 = sphi 0, %s209
    $region4: #{tpu_custom_call.1} parent=1 // loop_header_branch
      %25 = sbr.rel (%p23) target = $region8
    $region5: #{tpu_custom_call.1} parent=1 // loop_body
      %s27 = ssub.s32 %s22, 1
      %s28 = ssub.s32 %s22, 2
      %s29 = sadd.s32 %s22, 1
      %s30 = ssub.s32 %s22, %s29
      %p31 = scmp.eq.s32.totalorder %s30, 0
      %s33 = sadd.s32 %s32, 1
      %s34 = scalar_select %p31, %s32, %s33
      %p37 = pneg %p31
      %p38 = scmp.eq.s32.totalorder %s22, 1
      %p39 = por %p37, %p38
      %p40 = scmp.ne.s32.totalorder %s32, %s35
      %p41 = scmp.eq.s32.totalorder %s22, 0
      %p42 = por %p40, %p41
      %p43 = scmp.ne.s32.totalorder %s32, %s35
      %p44 = scmp.eq.s32.totalorder %s27, 1
      %p45 = por %p43, %p44
      %p46 = scmp.ne.s32.totalorder %s35, %s36
      %p47 = scmp.eq.s32.totalorder %s27, 0
      %p48 = por %p46, %p47
      %p49 = scmp.ne.s32.totalorder %s35, %s36
      %p50 = scmp.eq.s32.totalorder %s28, 1
      %p51 = por %p49, %p50
      %p53 = scmp.ne.s32.totalorder %s36, %s52
      %p54 = scmp.eq.s32.totalorder %s28, 0
      %p55 = por %p53, %p54
      %s57 = sadd.s32 %s56, 1
      %p60 = scmp.eq.s32.totalorder %s22, 1
      %p61 = scmp.ne.s32.totalorder %s56, %s58
      %p62 = scmp.eq.s32.totalorder %s22, 0
      %p63 = por %p61, %p62
      %p64 = scmp.ne.s32.totalorder %s56, %s58
      %p65 = scmp.eq.s32.totalorder %s27, 1
      %p66 = por %p64, %p65
      %p67 = scmp.ne.s32.totalorder %s58, %s59
      %p68 = scmp.eq.s32.totalorder %s27, 0
      %p69 = por %p67, %p68
      %p70 = scmp.ne.s32.totalorder %s58, %s59
      %p71 = scmp.eq.s32.totalorder %s28, 1
      %p72 = por %p70, %p71
      %p74 = scmp.ne.s32.totalorder %s59, %s73
      %p75 = scmp.eq.s32.totalorder %s28, 0
      %p76 = por %p74, %p75
      %s78 = sadd.s32 %s77, 1
      %p81 = scmp.eq.s32.totalorder %s22, 1
      %p82 = scmp.ne.s32.totalorder %s77, %s79
      %p83 = scmp.eq.s32.totalorder %s22, 0
      %p84 = por %p82, %p83
      %p85 = scmp.ne.s32.totalorder %s77, %s79
      %p86 = scmp.eq.s32.totalorder %s27, 1
      %p87 = por %p85, %p86
      %p88 = scmp.ne.s32.totalorder %s79, %s80
      %p89 = scmp.eq.s32.totalorder %s27, 0
      %p90 = por %p88, %p89
      %p91 = scmp.ne.s32.totalorder %s79, %s80
      %p92 = scmp.eq.s32.totalorder %s28, 1
      %p93 = por %p91, %p92
      %p95 = scmp.ne.s32.totalorder %s80, %s94
      %p96 = scmp.eq.s32.totalorder %s28, 0
      %p97 = por %p95, %p96
      %s99 = sadd.s32 %s98, 1
      %p102 = scmp.eq.s32.totalorder %s22, 1
      %p103 = scmp.ne.s32.totalorder %s98, %s100
      %p104 = scmp.eq.s32.totalorder %s22, 0
      %p105 = por %p103, %p104
      %p106 = scmp.ne.s32.totalorder %s98, %s100
      %p107 = scmp.eq.s32.totalorder %s27, 1
      %p108 = por %p106, %p107
      %p109 = scmp.ne.s32.totalorder %s100, %s101
      %p110 = scmp.eq.s32.totalorder %s27, 0
      %p111 = por %p109, %p110
      %p112 = scmp.ne.s32.totalorder %s100, %s101
      %p113 = scmp.eq.s32.totalorder %s28, 1
      %p114 = por %p112, %p113
      %p116 = scmp.ne.s32.totalorder %s101, %s115
      %p117 = scmp.eq.s32.totalorder %s28, 0
      %p118 = por %p116, %p117
      %s120 = sadd.s32 %s119, 1
      %p123 = scmp.eq.s32.totalorder %s22, 1
      %p124 = scmp.ne.s32.totalorder %s119, %s121
      %p125 = scmp.eq.s32.totalorder %s22, 0
      %p126 = por %p124, %p125
      %p127 = scmp.ne.s32.totalorder %s119, %s121
      %p128 = scmp.eq.s32.totalorder %s27, 1
      %p129 = por %p127, %p128
      %p130 = scmp.ne.s32.totalorder %s121, %s122
      %p131 = scmp.eq.s32.totalorder %s27, 0
      %p132 = por %p130, %p131
      %p133 = scmp.ne.s32.totalorder %s121, %s122
      %p134 = scmp.eq.s32.totalorder %s28, 1
      %p135 = por %p133, %p134
      %p137 = scmp.ne.s32.totalorder %s122, %s136
      %p138 = scmp.eq.s32.totalorder %s28, 0
      %p139 = por %p137, %p138
      %s141 = sadd.s32 %s140, 1
      %p144 = scmp.eq.s32.totalorder %s22, 1
      %p145 = scmp.ne.s32.totalorder %s140, %s142
      %p146 = scmp.eq.s32.totalorder %s22, 0
      %p147 = por %p145, %p146
      %p148 = scmp.ne.s32.totalorder %s140, %s142
      %p149 = scmp.eq.s32.totalorder %s27, 1
      %p150 = por %p148, %p149
      %p151 = scmp.ne.s32.totalorder %s142, %s143
      %p152 = scmp.eq.s32.totalorder %s27, 0
      %p153 = por %p151, %p152
      %p154 = scmp.ne.s32.totalorder %s142, %s143
      %p155 = scmp.eq.s32.totalorder %s28, 1
      %p156 = por %p154, %p155
      %p158 = scmp.ne.s32.totalorder %s143, %s157
      %p159 = scmp.eq.s32.totalorder %s28, 0
      %p160 = por %p158, %p159
      %s162 = sadd.s32 %s161, 1
      %p165 = scmp.eq.s32.totalorder %s22, 1
      %p166 = scmp.ne.s32.totalorder %s161, %s163
      %p167 = scmp.eq.s32.totalorder %s22, 0
      %p168 = por %p166, %p167
      %p169 = scmp.ne.s32.totalorder %s161, %s163
      %p170 = scmp.eq.s32.totalorder %s27, 1
      %p171 = por %p169, %p170
      %p172 = scmp.ne.s32.totalorder %s163, %s164
      %p173 = scmp.eq.s32.totalorder %s27, 0
      %p174 = por %p172, %p173
      %p175 = scmp.ne.s32.totalorder %s163, %s164
      %p176 = scmp.eq.s32.totalorder %s28, 1
      %p177 = por %p175, %p176
      %p179 = scmp.ne.s32.totalorder %s164, %s178
      %p180 = scmp.eq.s32.totalorder %s28, 0
      %p181 = por %p179, %p180
      %s183 = sadd.s32 %s182, 1
      %p186 = scmp.eq.s32.totalorder %s22, 1
      %p187 = scmp.ne.s32.totalorder %s182, %s184
      %p188 = scmp.eq.s32.totalorder %s22, 0
      %p189 = por %p187, %p188
      %p190 = scmp.ne.s32.totalorder %s182, %s184
      %p191 = scmp.eq.s32.totalorder %s27, 1
      %p192 = por %p190, %p191
      %p193 = scmp.ne.s32.totalorder %s184, %s185
      %p194 = scmp.eq.s32.totalorder %s27, 0
      %p195 = por %p193, %p194
      %p196 = scmp.ne.s32.totalorder %s184, %s185
      %p197 = scmp.eq.s32.totalorder %s28, 1
      %p198 = por %p196, %p197
      %p200 = scmp.ne.s32.totalorder %s185, %s199
      %p201 = scmp.eq.s32.totalorder %s28, 0
      %p202 = por %p200, %p201
      %s203 = ssub.s32 %s22, %s29
      %p204 = scmp.eq.s32.totalorder %s203, 0
      %s206 = sadd.s32 %s205, 1
      %s207 = scalar_select %p204, %s205, %s206
      %p210 = pneg %p204
      %p211 = scmp.eq.s32.totalorder %s22, 1
      %p212 = por %p210, %p211
      %p213 = scmp.ne.s32.totalorder %s205, %s208
      %p214 = scmp.eq.s32.totalorder %s22, 0
      %p215 = por %p213, %p214
      %p216 = scmp.ne.s32.totalorder %s205, %s208
      %p217 = scmp.eq.s32.totalorder %s27, 1
      %p218 = por %p216, %p217
      %p219 = scmp.ne.s32.totalorder %s208, %s209
      %p220 = scmp.eq.s32.totalorder %s27, 0
      %p221 = por %p219, %p220
      %p222 = scmp.ne.s32.totalorder %s208, %s209
      %p223 = scmp.eq.s32.totalorder %s28, 1
      %p224 = por %p222, %p223
      %p226 = scmp.ne.s32.totalorder %s209, %s225
      %p227 = scmp.eq.s32.totalorder %s28, 0
      %p228 = por %p226, %p227
      %p229 = scmp.le.s32.totalorder 1, %s22
      %p230 = scmp.lt.s32.totalorder %s22, 3
      %p231 = pnand %p229, %p230
      %p232 = pneg %p231
      // Predicated region
      $region9: #{tpu_custom_call.1} parent=5 // pred_check
        _
      $region10: #{tpu_custom_call.1} parent=5 // pred_check_branch
        %234 = sbr.rel (%p231) target = $region12
      $region11: #{tpu_custom_call.1} parent=5 // pred_region
        %s235 = ssub.s32 %s22, 1
        // Predicated region
        $region13: #{tpu_custom_call.1} parent=11 // pred_check
          %p236 = pneg %p69
        $region14: #{tpu_custom_call.1} parent=11 // pred_check_branch
          %238 = sbr.rel (%p236) target = $region16
        $region15: #{tpu_custom_call.1} parent=11 // pred_region
          _
        $region16: #{tpu_custom_call.1} parent=11 // pred_fallthru
          _
        // Predicated region
        $region17: #{tpu_custom_call.1} parent=11 // pred_check
          %p239 = pneg %p90
        $region18: #{tpu_custom_call.1} parent=11 // pred_check_branch
          %241 = sbr.rel (%p239) target = $region20
        $region19: #{tpu_custom_call.1} parent=11 // pred_region
          _
        $region20: #{tpu_custom_call.1} parent=11 // pred_fallthru
          _
        // Predicated region
        $region21: #{tpu_custom_call.1} parent=11 // pred_check
          %p242 = pneg %p111
        $region22: #{tpu_custom_call.1} parent=11 // pred_check_branch
          %244 = sbr.rel (%p242) target = $region24
        $region23: #{tpu_custom_call.1} parent=11 // pred_region
          _
        $region24: #{tpu_custom_call.1} parent=11 // pred_fallthru
          _
        // Predicated region
        $region25: #{tpu_custom_call.1} parent=11 // pred_check
          %p245 = pneg %p132
        $region26: #{tpu_custom_call.1} parent=11 // pred_check_branch
          %247 = sbr.rel (%p245) target = $region28
        $region27: #{tpu_custom_call.1} parent=11 // pred_region
          _
        $region28: #{tpu_custom_call.1} parent=11 // pred_fallthru
          _
        // Predicated region
        $region29: #{tpu_custom_call.1} parent=11 // pred_check
          %p248 = pneg %p153
        $region30: #{tpu_custom_call.1} parent=11 // pred_check_branch
          %250 = sbr.rel (%p248) target = $region32
        $region31: #{tpu_custom_call.1} parent=11 // pred_region
          _
        $region32: #{tpu_custom_call.1} parent=11 // pred_fallthru
          _
        // Predicated region
        $region33: #{tpu_custom_call.1} parent=11 // pred_check
          %p251 = pneg %p174
        $region34: #{tpu_custom_call.1} parent=11 // pred_check_branch
          %253 = sbr.rel (%p251) target = $region36
        $region35: #{tpu_custom_call.1} parent=11 // pred_region
          _
        $region36: #{tpu_custom_call.1} parent=11 // pred_fallthru
          _
        // Predicated region
        $region37: #{tpu_custom_call.1} parent=11 // pred_check
          %p254 = pneg %p195
        $region38: #{tpu_custom_call.1} parent=11 // pred_check_branch
          %256 = sbr.rel (%p254) target = $region40
        $region39: #{tpu_custom_call.1} parent=11 // pred_region
          _
        $region40: #{tpu_custom_call.1} parent=11 // pred_fallthru
          _
      $region12: #{tpu_custom_call.1} parent=5 // pred_fallthru
        _
      %p257 = scmp.lt.s32.totalorder %s22, 2
      // Predicated region
      $region41: #{tpu_custom_call.1} parent=5 // pred_check
        %p258 = pneg %p257
      $region42: #{tpu_custom_call.1} parent=5 // pred_check_branch
        %260 = sbr.rel (%p258) target = $region44
      $region43: #{tpu_custom_call.1} parent=5 // pred_region
        // Predicated region
        $region45: #{tpu_custom_call.1} parent=43 // pred_check
          %p261 = pneg %p42
        $region46: #{tpu_custom_call.1} parent=43 // pred_check_branch
          %263 = sbr.rel (%p261) target = $region48
        $region47: #{tpu_custom_call.1} parent=43 // pred_region
          %s264 = sand.u32 %s32, 1
          %s265 = scalar_lea.sflag [#allocation4], %s264
          %s266 = sand.u32 %s32, 1
          %s267 = smul.addr %s266, 64
          %s268 = scalar_lea.vmem [#allocation3], %s267
          %s270 = ssub.s32 1024, 1024
          %271 = vsyncadd %s265, %s270
          %s272 = smul.addr %s22, 8
          %s273 = smul.addr %s272, 128
          %s274 = scalar_lea.hbm %s0, %s273
          %s275 = sshll.u32 %s268, 4
          %s276 = int_to_ptr.vmem [resolvable:$true] %s275
          %281 = dma.hbm_to_vmem [thread:$0]  %s274, 1024, %s276, %s265, 128, 128, 8
        $region48: #{tpu_custom_call.1} parent=43 // pred_fallthru
          _
      $region44: #{tpu_custom_call.1} parent=5 // pred_fallthru
        _
      %p282 = scmp.le.s32.totalorder 1, %s22
      %p283 = scmp.lt.s32.totalorder %s22, 3
      %p284 = pnand %p282, %p283
      %p285 = pneg %p284
      // Predicated region
      $region49: #{tpu_custom_call.1} parent=5 // pred_check
        _
      $region50: #{tpu_custom_call.1} parent=5 // pred_check_branch
        %287 = sbr.rel (%p284) target = $region52
      $region51: #{tpu_custom_call.1} parent=5 // pred_region
        %s288 = ssub.s32 %s22, 1
        %s289 = sand.u32 %s35, 1
        %s290 = scalar_lea.sflag [#allocation4], %s289
        %s291 = sand.u32 %s35, 1
        %s292 = smul.addr %s291, 64
        %s293 = scalar_lea.vmem [#allocation3], %s292
        // Predicated region
        $region53: #{tpu_custom_call.1} parent=51 // pred_check
          %p294 = pneg %p48
        $region54: #{tpu_custom_call.1} parent=51 // pred_check_branch
          %296 = sbr.rel (%p294) target = $region56
        $region55: #{tpu_custom_call.1} parent=51 // pred_region
          %297 = dma.done %s290, 1024
        $region56: #{tpu_custom_call.1} parent=51 // pred_fallthru
          _
        %s298 = sand.u32 %s35, 1
        %s299 = scalar_lea.sflag [#allocation4], %s298
        %s300 = sand.u32 %s35, 1
        %s301 = smul.addr %s300, 64
        %s302 = scalar_lea.vmem [#allocation3], %s301
        %p303 = pneg %p48
        %p304 = pneg %p45
        %p305 = pneg %p69
        %p306 = pneg %p66
        %p307 = pneg %p90
        %p308 = pneg %p87
        %p309 = pneg %p111
        %p310 = pneg %p108
        %p311 = pneg %p132
        %p312 = pneg %p129
        %p313 = pneg %p153
        %p314 = pneg %p150
        %p315 = pneg %p174
        %p316 = pneg %p171
        %p317 = pneg %p195
        %p318 = pneg %p192
        %p319 = pneg %p221
        %p320 = pneg %p218
        %s321 = sand.u32 %s208, 1
        %s322 = scalar_lea.sflag [#allocation5], %s321
        %s323 = sand.u32 %s208, 1
        %s324 = smul.addr %s323, 64
        %s325 = scalar_lea.vmem [#allocation6], %s324
        %v326 = vld [vmem:[%s293] sm:$0xff]
        %v327 = vld [vmem:[%s293 + $0x8] sm:$0xff]
        %v328 = vld [vmem:[%s293 + $0x10] sm:$0xff]
        %v329 = vld [vmem:[%s293 + $0x18] sm:$0xff]
        %v330 = vld [vmem:[%s293 + $0x20] sm:$0xff]
        %v331 = vld [vmem:[%s293 + $0x28] sm:$0xff]
        %v332 = vld [vmem:[%s293 + $0x30] sm:$0xff]
        %v333 = vld [vmem:[%s293 + $0x38] sm:$0xff]
        %v334 = vld [vmem:[%s1] sm:$0xff]
        %v335 = vld [vmem:[%s2] sm:$0xff]
        %v336 = vmul.f32 %v334, %v334
        %vm337 = vcmask 523264
        %v338 = vsel %vm337, %v336, 0.0
        %339 = vadd.xlane.f32.xlu0 %v338
        %v340 = vpop.xlane.xlu0 %339
        %v341 = vrsqrt.pop %v340
        %v342 = vmul.f32 %v335, %v341
        %344 = vset.pattern.permute.xlu0 0
        %345 = vperm.xlu0 %344, %v342
        %v346 = vpop.permute.xlu0 %345
        %v348 = vmul.f32 %v334, %v346
        %v349 = vld [vmem:[%s3] sm:$0xff]
        %v350 = vld [vmem:[%s4] sm:$0xff]
        %v351 = vmul.f32 %v349, %v349
        %v352 = vsel %vm337, %v351, 0.0
        %353 = vadd.xlane.f32.xlu0 %v352
        %v354 = vpop.xlane.xlu0 %353
        %v355 = vrsqrt.pop %v354
        %v356 = vmul.f32 %v350, %v355
        %358 = vset.pattern.permute.xlu0 0
        %359 = vperm.xlu0 %358, %v356
        %v360 = vpop.permute.xlu0 %359
        %v362 = vmul.f32 %v349, %v360
        %v363 = vld [vmem:[%s5] sm:$0xff]
        %v364 = vld [vmem:[%s5 + $0x8] sm:$0xff]
        %v365 = vld [vmem:[%s5 + $0x10] sm:$0xff]
        %v366 = vld [vmem:[%s5 + $0x18] sm:$0xff]
        %v367 = vld [vmem:[%s5 + $0x20] sm:$0xff]
        %v368 = vld [vmem:[%s5 + $0x28] sm:$0xff]
        %v369 = vld [vmem:[%s5 + $0x30] sm:$0xff]
        %v370 = vld [vmem:[%s5 + $0x38] sm:$0xff]
        %v371 = vld [vmem:[%s6] sm:$0xff]
        %v372 = vld [vmem:[%s6 + $0x8] sm:$0xff]
        %v373 = vld [vmem:[%s6 + $0x10] sm:$0xff]
        %v374 = vld [vmem:[%s6 + $0x18] sm:$0xff]
        %v375 = vld [vmem:[%s6 + $0x20] sm:$0xff]
        %v376 = vld [vmem:[%s6 + $0x28] sm:$0xff]
        %v377 = vld [vmem:[%s6 + $0x30] sm:$0xff]
        %v378 = vld [vmem:[%s6 + $0x38] sm:$0xff]
        %v379 = vmul.f32 %v363, %v363
        %v380 = vmul.f32 %v364, %v364
        %v381 = vmul.f32 %v365, %v365
        %v382 = vmul.f32 %v366, %v366
        %v383 = vmul.f32 %v367, %v367
        %v384 = vmul.f32 %v368, %v368
        %v385 = vmul.f32 %v369, %v369
        %v386 = vmul.f32 %v370, %v370
        %v387 = vsel %vm337, %v379, 0.0
        %388 = vadd.xlane.f32.xlu0 %v387
        %v389 = vpop.xlane.xlu0 %388
        %v390 = vsel %vm337, %v380, 0.0
        %391 = vadd.xlane.f32.xlu0 %v390
        %v392 = vpop.xlane.xlu0 %391
        %v393 = vsel %vm337, %v381, 0.0
        %394 = vadd.xlane.f32.xlu0 %v393
        %v395 = vpop.xlane.xlu0 %394
        %v396 = vsel %vm337, %v382, 0.0
        %397 = vadd.xlane.f32.xlu0 %v396
        %v398 = vpop.xlane.xlu0 %397
        %v399 = vsel %vm337, %v383, 0.0
        %400 = vadd.xlane.f32.xlu0 %v399
        %v401 = vpop.xlane.xlu0 %400
        %v402 = vsel %vm337, %v384, 0.0
        %403 = vadd.xlane.f32.xlu0 %v402
        %v404 = vpop.xlane.xlu0 %403
        %v405 = vsel %vm337, %v385, 0.0
        %406 = vadd.xlane.f32.xlu0 %v405
        %v407 = vpop.xlane.xlu0 %406
        %v408 = vsel %vm337, %v386, 0.0
        %409 = vadd.xlane.f32.xlu0 %v408
        %v410 = vpop.xlane.xlu0 %409
        %v411 = vrsqrt.pop %v389
        %v412 = vrsqrt.pop %v392
        %v413 = vrsqrt.pop %v395
        %v414 = vrsqrt.pop %v398
        %v415 = vrsqrt.pop %v401
        %v416 = vrsqrt.pop %v404
        %v417 = vrsqrt.pop %v407
        %v418 = vrsqrt.pop %v410
        %v419 = vmul.f32 %v371, %v411
        %v420 = vmul.f32 %v372, %v412
        %v421 = vmul.f32 %v373, %v413
        %v422 = vmul.f32 %v374, %v414
        %v423 = vmul.f32 %v375, %v415
        %v424 = vmul.f32 %v376, %v416
        %v425 = vmul.f32 %v377, %v417
        %v426 = vmul.f32 %v378, %v418
        %428 = vset.pattern.permute.xlu0 0
        %429 = vperm.xlu0 %428, %v419
        %v430 = vpop.permute.xlu0 %429
        %433 = vset.pattern.permute.xlu0 0
        %434 = vperm.xlu0 %433, %v420
        %v435 = vpop.permute.xlu0 %434
        %438 = vset.pattern.permute.xlu0 0
        %439 = vperm.xlu0 %438, %v421
        %v440 = vpop.permute.xlu0 %439
        %443 = vset.pattern.permute.xlu0 0
        %444 = vperm.xlu0 %443, %v422
        %v445 = vpop.permute.xlu0 %444
        %448 = vset.pattern.permute.xlu0 0
        %449 = vperm.xlu0 %448, %v423
        %v450 = vpop.permute.xlu0 %449
        %453 = vset.pattern.permute.xlu0 0
        %454 = vperm.xlu0 %453, %v424
        %v455 = vpop.permute.xlu0 %454
        %458 = vset.pattern.permute.xlu0 0
        %459 = vperm.xlu0 %458, %v425
        %v460 = vpop.permute.xlu0 %459
        %463 = vset.pattern.permute.xlu0 0
        %464 = vperm.xlu0 %463, %v426
        %v465 = vpop.permute.xlu0 %464
        %v467 = vmul.f32 %v363, %v430
        %v468 = vmul.f32 %v364, %v435
        %v469 = vmul.f32 %v365, %v440
        %v470 = vmul.f32 %v366, %v445
        %v471 = vmul.f32 %v367, %v450
        %v472 = vmul.f32 %v368, %v455
        %v473 = vmul.f32 %v369, %v460
        %v474 = vmul.f32 %v370, %v465
        %v476 = vsel %vm337, %v348, 0
        %478 = vmatprep.subr.mxu0 0.0
        %479 = vmatpush1.msra.mxu0 0.0
        %480 = vmatprep.subr.mxu0 0.0
        %481 = vmatpush1.msra.mxu0 0.0
        %482 = vmatprep.subr.mxu0 0.0
        %483 = vmatpush1.msra.mxu0 0.0
        %484 = vmatprep.subr.mxu0 0.0
        %485 = vmatpush1.msra.mxu0 0.0
        %486 = vmatprep.subr.mxu0 0.0
        %487 = vmatpush1.msra.mxu0 0.0
        %488 = vmatprep.subr.mxu0 0.0
        %489 = vmatpush1.msra.mxu0 0.0
        %490 = vmatprep.subr.mxu0 0.0
        %491 = vmatpush1.msra.mxu0 0.0
        %492 = vmatprep.subr.mxu0 0.0
        %493 = vmatpush1.msra.mxu0 0.0
        %494 = vmatprep.subr.mxu0 0.0
        %495 = vmatpush1.msra.mxu0 %v333
        %496 = vmatprep.subr.mxu0 0.0
        %497 = vmatpush1.msra.mxu0 %v332
        %498 = vmatprep.subr.mxu0 0.0
        %499 = vmatpush1.msra.mxu0 %v331
        %500 = vmatprep.subr.mxu0 0.0
        %501 = vmatpush1.msra.mxu0 %v330
        %502 = vmatprep.subr.mxu0 0.0
        %503 = vmatpush1.msra.mxu0 %v329
        %504 = vmatprep.subr.mxu0 0.0
        %505 = vmatpush1.msra.mxu0 %v328
        %506 = vmatprep.subr.mxu0 0.0
        %507 = vmatpush1.msra.mxu0 %v327
        %508 = vmatprep.subr.mxu0 0.0
        %509 = vmatpush1.msra.mxu0 %v326
        %510 = vmatprep.subr.mxu0 0.0
        %511 = vmatpush2.msra.mxu0 0.0
        %512 = vmatprep.subr.mxu0 0.0
        %513 = vmatpush2.msra.mxu0 0.0
        %514 = vmatprep.subr.mxu0 0.0
        %515 = vmatpush2.msra.mxu0 0.0
        %516 = vmatprep.subr.mxu0 0.0
        %517 = vmatpush2.msra.mxu0 0.0
        %518 = vmatprep.subr.mxu0 0.0
        %519 = vmatpush2.msra.mxu0 0.0
        %520 = vmatprep.subr.mxu0 0.0
        %521 = vmatpush2.msra.mxu0 0.0
        %522 = vmatprep.subr.mxu0 0.0
        %523 = vmatpush2.msra.mxu0 0.0
        %524 = vmatprep.subr.mxu0 0.0
        %525 = vmatpush2.msra.mxu0 0.0
        %526 = vmatprep.subr.mxu0 0.0
        %527 = vmatpush2.msra.mxu0 0.0
        %528 = vmatprep.subr.mxu0 0.0
        %529 = vmatpush2.msra.mxu0 0.0
        %530 = vmatprep.subr.mxu0 0.0
        %531 = vmatpush2.msra.mxu0 0.0
        %532 = vmatprep.subr.mxu0 0.0
        %533 = vmatpush2.msra.mxu0 0.0
        %534 = vmatprep.subr.mxu0 0.0
        %535 = vmatpush2.msra.mxu0 0.0
        %536 = vmatprep.subr.mxu0 0.0
        %537 = vmatpush2.msra.mxu0 0.0
        %538 = vmatprep.subr.mxu0 0.0
        %539 = vmatpush2.msra.mxu0 0.0
        %540 = vmatprep.subr.mxu0 0.0
        %541 = vmatpush2.msra.mxu0 0.0
        %542 = vmatprep.mubr.f32.mxu0 0.0
        %543 = vmatmul.mubr.f32.gmra.mxu0 %v476
        %v544 = vpop.f32.mrf.mxu0
        %v545 = vadd.f32 0.0, %v544
        %v546 = vpop.f32.mrf.mxu0
        %547 = vdwg.mxu0
        %v549 = vsel %vm337, %v362, 0
        %551 = vmatprep.subr.mxu0 0.0
        %552 = vmatpush1.msra.mxu0 0.0
        %553 = vmatprep.subr.mxu0 0.0
        %554 = vmatpush1.msra.mxu0 0.0
        %555 = vmatprep.subr.mxu0 0.0
        %556 = vmatpush1.msra.mxu0 0.0
        %557 = vmatprep.subr.mxu0 0.0
        %558 = vmatpush1.msra.mxu0 0.0
        %559 = vmatprep.subr.mxu0 0.0
        %560 = vmatpush1.msra.mxu0 0.0
        %561 = vmatprep.subr.mxu0 0.0
        %562 = vmatpush1.msra.mxu0 0.0
        %563 = vmatprep.subr.mxu0 0.0
        %564 = vmatpush1.msra.mxu0 0.0
        %565 = vmatprep.subr.mxu0 0.0
        %566 = vmatpush1.msra.mxu0 0.0
        %567 = vmatprep.subr.mxu0 0.0
        %568 = vmatpush1.msra.mxu0 %v333
        %569 = vmatprep.subr.mxu0 0.0
        %570 = vmatpush1.msra.mxu0 %v332
        %571 = vmatprep.subr.mxu0 0.0
        %572 = vmatpush1.msra.mxu0 %v331
        %573 = vmatprep.subr.mxu0 0.0
        %574 = vmatpush1.msra.mxu0 %v330
        %575 = vmatprep.subr.mxu0 0.0
        %576 = vmatpush1.msra.mxu0 %v329
        %577 = vmatprep.subr.mxu0 0.0
        %578 = vmatpush1.msra.mxu0 %v328
        %579 = vmatprep.subr.mxu0 0.0
        %580 = vmatpush1.msra.mxu0 %v327
        %581 = vmatprep.subr.mxu0 0.0
        %582 = vmatpush1.msra.mxu0 %v326
        %583 = vmatprep.subr.mxu0 0.0
        %584 = vmatpush2.msra.mxu0 0.0
        %585 = vmatprep.subr.mxu0 0.0
        %586 = vmatpush2.msra.mxu0 0.0
        %587 = vmatprep.subr.mxu0 0.0
        %588 = vmatpush2.msra.mxu0 0.0
        %589 = vmatprep.subr.mxu0 0.0
        %590 = vmatpush2.msra.mxu0 0.0
        %591 = vmatprep.subr.mxu0 0.0
        %592 = vmatpush2.msra.mxu0 0.0
        %593 = vmatprep.subr.mxu0 0.0
        %594 = vmatpush2.msra.mxu0 0.0
        %595 = vmatprep.subr.mxu0 0.0
        %596 = vmatpush2.msra.mxu0 0.0
        %597 = vmatprep.subr.mxu0 0.0
        %598 = vmatpush2.msra.mxu0 0.0
        %599 = vmatprep.subr.mxu0 0.0
        %600 = vmatpush2.msra.mxu0 0.0
        %601 = vmatprep.subr.mxu0 0.0
        %602 = vmatpush2.msra.mxu0 0.0
        %603 = vmatprep.subr.mxu0 0.0
        %604 = vmatpush2.msra.mxu0 0.0
        %605 = vmatprep.subr.mxu0 0.0
        %606 = vmatpush2.msra.mxu0 0.0
        %607 = vmatprep.subr.mxu0 0.0
        %608 = vmatpush2.msra.mxu0 0.0
        %609 = vmatprep.subr.mxu0 0.0
        %610 = vmatpush2.msra.mxu0 0.0
        %611 = vmatprep.subr.mxu0 0.0
        %612 = vmatpush2.msra.mxu0 0.0
        %613 = vmatprep.subr.mxu0 0.0
        %614 = vmatpush2.msra.mxu0 0.0
        %615 = vmatprep.mubr.f32.mxu0 0.0
        %616 = vmatmul.mubr.f32.gmra.mxu0 %v549
        %v617 = vpop.f32.mrf.mxu0
        %v618 = vadd.f32 0.0, %v617
        %v619 = vpop.f32.mrf.mxu0
        %620 = vdwg.mxu0
        %v622 = vsel %vm337, %v467, 0
        %v625 = vsel %vm337, %v468, 0
        %v628 = vsel %vm337, %v469, 0
        %v631 = vsel %vm337, %v470, 0
        %v634 = vsel %vm337, %v471, 0
        %v637 = vsel %vm337, %v472, 0
        %v640 = vsel %vm337, %v473, 0
        %v643 = vsel %vm337, %v474, 0
        %645 = vmatprep.subr.mxu0 0.0
        %646 = vmatpush1.msra.mxu0 0.0
        %647 = vmatprep.subr.mxu0 0.0
        %648 = vmatpush1.msra.mxu0 0.0
        %649 = vmatprep.subr.mxu0 0.0
        %650 = vmatpush1.msra.mxu0 0.0
        %651 = vmatprep.subr.mxu0 0.0
        %652 = vmatpush1.msra.mxu0 0.0
        %653 = vmatprep.subr.mxu0 0.0
        %654 = vmatpush1.msra.mxu0 0.0
        %655 = vmatprep.subr.mxu0 0.0
        %656 = vmatpush1.msra.mxu0 0.0
        %657 = vmatprep.subr.mxu0 0.0
        %658 = vmatpush1.msra.mxu0 0.0
        %659 = vmatprep.subr.mxu0 0.0
        %660 = vmatpush1.msra.mxu0 0.0
        %661 = vmatprep.subr.mxu0 0.0
        %662 = vmatpush1.msra.mxu0 %v333
        %663 = vmatprep.subr.mxu0 0.0
        %664 = vmatpush1.msra.mxu0 %v332
        %665 = vmatprep.subr.mxu0 0.0
        %666 = vmatpush1.msra.mxu0 %v331
        %667 = vmatprep.subr.mxu0 0.0
        %668 = vmatpush1.msra.mxu0 %v330
        %669 = vmatprep.subr.mxu0 0.0
        %670 = vmatpush1.msra.mxu0 %v329
        %671 = vmatprep.subr.mxu0 0.0
        %672 = vmatpush1.msra.mxu0 %v328
        %673 = vmatprep.subr.mxu0 0.0
        %674 = vmatpush1.msra.mxu0 %v327
        %675 = vmatprep.subr.mxu0 0.0
        %676 = vmatpush1.msra.mxu0 %v326
        %677 = vmatprep.subr.mxu0 0.0
        %678 = vmatpush2.msra.mxu0 0.0
        %679 = vmatprep.subr.mxu0 0.0
        %680 = vmatpush2.msra.mxu0 0.0
        %681 = vmatprep.subr.mxu0 0.0
        %682 = vmatpush2.msra.mxu0 0.0
        %683 = vmatprep.subr.mxu0 0.0
        %684 = vmatpush2.msra.mxu0 0.0
        %685 = vmatprep.subr.mxu0 0.0
        %686 = vmatpush2.msra.mxu0 0.0
        %687 = vmatprep.subr.mxu0 0.0
        %688 = vmatpush2.msra.mxu0 0.0
        %689 = vmatprep.subr.mxu0 0.0
        %690 = vmatpush2.msra.mxu0 0.0
        %691 = vmatprep.subr.mxu0 0.0
        %692 = vmatpush2.msra.mxu0 0.0
        %693 = vmatprep.subr.mxu0 0.0
        %694 = vmatpush2.msra.mxu0 0.0
        %695 = vmatprep.subr.mxu0 0.0
        %696 = vmatpush2.msra.mxu0 0.0
        %697 = vmatprep.subr.mxu0 0.0
        %698 = vmatpush2.msra.mxu0 0.0
        %699 = vmatprep.subr.mxu0 0.0
        %700 = vmatpush2.msra.mxu0 0.0
        %701 = vmatprep.subr.mxu0 0.0
        %702 = vmatpush2.msra.mxu0 0.0
        %703 = vmatprep.subr.mxu0 0.0
        %704 = vmatpush2.msra.mxu0 0.0
        %705 = vmatprep.subr.mxu0 0.0
        %706 = vmatpush2.msra.mxu0 0.0
        %707 = vmatprep.subr.mxu0 0.0
        %708 = vmatpush2.msra.mxu0 0.0
        %709 = vmatprep.mubr.f32.mxu0 0.0
        %710 = vmatmul.mubr.f32.gmra.mxu0 %v622
        %v711 = vpop.f32.mrf.mxu0
        %v712 = vadd.f32 0.0, %v711
        %v713 = vpop.f32.mrf.mxu0
        %714 = vmatprep.mubr.f32.mxu0 0.0
        %715 = vmatmul.mubr.f32.gmra.mxu0 %v625
        %v716 = vpop.f32.mrf.mxu0
        %v717 = vadd.f32 0.0, %v716
        %v718 = vpop.f32.mrf.mxu0
        %719 = vmatprep.mubr.f32.mxu0 0.0
        %720 = vmatmul.mubr.f32.gmra.mxu0 %v628
        %v721 = vpop.f32.mrf.mxu0
        %v722 = vadd.f32 0.0, %v721
        %v723 = vpop.f32.mrf.mxu0
        %724 = vmatprep.mubr.f32.mxu0 0.0
        %725 = vmatmul.mubr.f32.gmra.mxu0 %v631
        %v726 = vpop.f32.mrf.mxu0
        %v727 = vadd.f32 0.0, %v726
        %v728 = vpop.f32.mrf.mxu0
        %729 = vmatprep.mubr.f32.mxu0 0.0
        %730 = vmatmul.mubr.f32.gmra.mxu0 %v634
        %v731 = vpop.f32.mrf.mxu0
        %v732 = vadd.f32 0.0, %v731
        %v733 = vpop.f32.mrf.mxu0
        %734 = vmatprep.mubr.f32.mxu0 0.0
        %735 = vmatmul.mubr.f32.gmra.mxu0 %v637
        %v736 = vpop.f32.mrf.mxu0
        %v737 = vadd.f32 0.0, %v736
        %v738 = vpop.f32.mrf.mxu0
        %739 = vmatprep.mubr.f32.mxu0 0.0
        %740 = vmatmul.mubr.f32.gmra.mxu0 %v640
        %v741 = vpop.f32.mrf.mxu0
        %v742 = vadd.f32 0.0, %v741
        %v743 = vpop.f32.mrf.mxu0
        %744 = vmatprep.mubr.f32.mxu0 0.0
        %745 = vmatmul.mubr.f32.gmra.mxu0 %v643
        %v746 = vpop.f32.mrf.mxu0
        %v747 = vadd.f32 0.0, %v746
        %v748 = vpop.f32.mrf.mxu0
        %749 = vdwg.mxu0
        %750 = vxpose.xlu0.b32.start [1/16] %v545, 128
        %751 = vxpose.xlu0.b32.cont [2/16] 0.0, 128
        %752 = vxpose.xlu0.b32.cont [3/16] 0.0, 128
        %753 = vxpose.xlu0.b32.cont [4/16] 0.0, 128
        %754 = vxpose.xlu0.b32.cont [5/16] 0.0, 128
        %755 = vxpose.xlu0.b32.cont [6/16] 0.0, 128
        %756 = vxpose.xlu0.b32.cont [7/16] 0.0, 128
        %757 = vxpose.xlu0.b32.cont [8/16] 0.0, 128
        %758 = vxpose.xlu0.b32.cont [9/16] 0.0, 128
        %759 = vxpose.xlu0.b32.cont [10/16] 0.0, 128
        %760 = vxpose.xlu0.b32.cont [11/16] 0.0, 128
        %761 = vxpose.xlu0.b32.cont [12/16] 0.0, 128
        %762 = vxpose.xlu0.b32.cont [13/16] 0.0, 128
        %763 = vxpose.xlu0.b32.cont [14/16] 0.0, 128
        %764 = vxpose.xlu0.b32.cont [15/16] 0.0, 128
        %765 = vxpose.xlu0.b32.end [16/16] 0.0, 128
        %v766 = vpop.trf.xlu0
        %v767 = vpop.trf.xlu0
        %v768 = vpop.trf.xlu0
        %v769 = vpop.trf.xlu0
        %v770 = vpop.trf.xlu0
        %v771 = vpop.trf.xlu0
        %v772 = vpop.trf.xlu0
        %v773 = vpop.trf.xlu0
        %v774 = vpop.trf.xlu0
        %v775 = vpop.trf.xlu0
        %v776 = vpop.trf.xlu0
        %v777 = vpop.trf.xlu0
        %v778 = vpop.trf.xlu0
        %v779 = vpop.trf.xlu0
        %v780 = vpop.trf.xlu0
        %v781 = vpop.trf.xlu0
        %vm782 = vcmask 64512
        %v784 = vsel %vm782, %v766, 0
        %v787 = vsel %vm782, %v767, 0
        %v790 = vsel %vm782, %v768, 0
        %v793 = vsel %vm782, %v769, 0
        %v796 = vsel %vm782, %v770, 0
        %v799 = vsel %vm782, %v771, 0
        %v802 = vsel %vm782, %v772, 0
        %v805 = vsel %vm782, %v773, 0
        %v808 = vsel %vm782, %v774, 0
        %v811 = vsel %vm782, %v775, 0
        %v814 = vsel %vm782, %v776, 0
        %v817 = vsel %vm782, %v777, 0
        %v820 = vsel %vm782, %v778, 0
        %v823 = vsel %vm782, %v779, 0
        %v826 = vsel %vm782, %v780, 0
        %v829 = vsel %vm782, %v781, 0
        %831 = vmatprep.subr.mxu0 0.0
        %832 = vmatpush1.msra.mxu0 0.0
        %833 = vmatprep.subr.mxu0 0.0
        %834 = vmatpush1.msra.mxu0 0.0
        %835 = vmatprep.subr.mxu0 0.0
        %836 = vmatpush1.msra.mxu0 0.0
        %837 = vmatprep.subr.mxu0 0.0
        %838 = vmatpush1.msra.mxu0 0.0
        %839 = vmatprep.subr.mxu0 0.0
        %840 = vmatpush1.msra.mxu0 0.0
        %841 = vmatprep.subr.mxu0 0.0
        %842 = vmatpush1.msra.mxu0 0.0
        %843 = vmatprep.subr.mxu0 0.0
        %844 = vmatpush1.msra.mxu0 0.0
        %845 = vmatprep.subr.mxu0 0.0
        %846 = vmatpush1.msra.mxu0 0.0
        %847 = vmatprep.subr.mxu0 0.0
        %848 = vmatpush1.msra.mxu0 0.0
        %849 = vmatprep.subr.mxu0 0.0
        %850 = vmatpush1.msra.mxu0 0.0
        %851 = vmatprep.subr.mxu0 0.0
        %852 = vmatpush1.msra.mxu0 0.0
        %853 = vmatprep.subr.mxu0 0.0
        %854 = vmatpush1.msra.mxu0 0.0
        %855 = vmatprep.subr.mxu0 0.0
        %856 = vmatpush1.msra.mxu0 0.0
        %857 = vmatprep.subr.mxu0 0.0
        %858 = vmatpush1.msra.mxu0 0.0
        %859 = vmatprep.subr.mxu0 0.0
        %860 = vmatpush1.msra.mxu0 0.0
        %861 = vmatprep.subr.mxu0 0.0
        %862 = vmatpush1.msra.mxu0 %v618
        %863 = vmatprep.subr.mxu0 0.0
        %864 = vmatpush2.msra.mxu0 0.0
        %865 = vmatprep.subr.mxu0 0.0
        %866 = vmatpush2.msra.mxu0 0.0
        %867 = vmatprep.subr.mxu0 0.0
        %868 = vmatpush2.msra.mxu0 0.0
        %869 = vmatprep.subr.mxu0 0.0
        %870 = vmatpush2.msra.mxu0 0.0
        %871 = vmatprep.subr.mxu0 0.0
        %872 = vmatpush2.msra.mxu0 0.0
        %873 = vmatprep.subr.mxu0 0.0
        %874 = vmatpush2.msra.mxu0 0.0
        %875 = vmatprep.subr.mxu0 0.0
        %876 = vmatpush2.msra.mxu0 0.0
        %877 = vmatprep.subr.mxu0 0.0
        %878 = vmatpush2.msra.mxu0 0.0
        %879 = vmatprep.subr.mxu0 0.0
        %880 = vmatpush2.msra.mxu0 0.0
        %881 = vmatprep.subr.mxu0 0.0
        %882 = vmatpush2.msra.mxu0 0.0
        %883 = vmatprep.subr.mxu0 0.0
        %884 = vmatpush2.msra.mxu0 0.0
        %885 = vmatprep.subr.mxu0 0.0
        %886 = vmatpush2.msra.mxu0 0.0
        %887 = vmatprep.subr.mxu0 0.0
        %888 = vmatpush2.msra.mxu0 0.0
        %889 = vmatprep.subr.mxu0 0.0
        %890 = vmatpush2.msra.mxu0 0.0
        %891 = vmatprep.subr.mxu0 0.0
        %892 = vmatpush2.msra.mxu0 0.0
        %893 = vmatprep.subr.mxu0 0.0
        %894 = vmatpush2.msra.mxu0 0.0
        %895 = vmatprep.mubr.f32.mxu0 0.0
        %896 = vmatmul.mubr.f32.gmra.mxu0 %v784
        %v897 = vpop.f32.mrf.mxu0
        %v898 = vadd.f32 0.0, %v897
        %v899 = vpop.f32.mrf.mxu0
        %900 = vmatprep.mubr.f32.mxu0 0.0
        %901 = vmatmul.mubr.f32.gmra.mxu0 %v787
        %v902 = vpop.f32.mrf.mxu0
        %v903 = vadd.f32 0.0, %v902
        %v904 = vpop.f32.mrf.mxu0
        %905 = vmatprep.mubr.f32.mxu0 0.0
        %906 = vmatmul.mubr.f32.gmra.mxu0 %v790
        %v907 = vpop.f32.mrf.mxu0
        %v908 = vadd.f32 0.0, %v907
        %v909 = vpop.f32.mrf.mxu0
        %910 = vmatprep.mubr.f32.mxu0 0.0
        %911 = vmatmul.mubr.f32.gmra.mxu0 %v793
        %v912 = vpop.f32.mrf.mxu0
        %v913 = vadd.f32 0.0, %v912
        %v914 = vpop.f32.mrf.mxu0
        %915 = vmatprep.mubr.f32.mxu0 0.0
        %916 = vmatmul.mubr.f32.gmra.mxu0 %v796
        %v917 = vpop.f32.mrf.mxu0
        %v918 = vadd.f32 0.0, %v917
        %v919 = vpop.f32.mrf.mxu0
        %920 = vmatprep.mubr.f32.mxu0 0.0
        %921 = vmatmul.mubr.f32.gmra.mxu0 %v799
        %v922 = vpop.f32.mrf.mxu0
        %v923 = vadd.f32 0.0, %v922
        %v924 = vpop.f32.mrf.mxu0
        %925 = vmatprep.mubr.f32.mxu0 0.0
        %926 = vmatmul.mubr.f32.gmra.mxu0 %v802
        %v927 = vpop.f32.mrf.mxu0
        %v928 = vadd.f32 0.0, %v927
        %v929 = vpop.f32.mrf.mxu0
        %930 = vmatprep.mubr.f32.mxu0 0.0
        %931 = vmatmul.mubr.f32.gmra.mxu0 %v805
        %v932 = vpop.f32.mrf.mxu0
        %v933 = vadd.f32 0.0, %v932
        %v934 = vpop.f32.mrf.mxu0
        %935 = vmatprep.mubr.f32.mxu0 0.0
        %936 = vmatmul.mubr.f32.gmra.mxu0 %v808
        %v937 = vpop.f32.mrf.mxu0
        %v938 = vadd.f32 0.0, %v937
        %v939 = vpop.f32.mrf.mxu0
        %940 = vmatprep.mubr.f32.mxu0 0.0
        %941 = vmatmul.mubr.f32.gmra.mxu0 %v811
        %v942 = vpop.f32.mrf.mxu0
        %v943 = vadd.f32 0.0, %v942
        %v944 = vpop.f32.mrf.mxu0
        %945 = vmatprep.mubr.f32.mxu0 0.0
        %946 = vmatmul.mubr.f32.gmra.mxu0 %v814
        %v947 = vpop.f32.mrf.mxu0
        %v948 = vadd.f32 0.0, %v947
        %v949 = vpop.f32.mrf.mxu0
        %950 = vmatprep.mubr.f32.mxu0 0.0
        %951 = vmatmul.mubr.f32.gmra.mxu0 %v817
        %v952 = vpop.f32.mrf.mxu0
        %v953 = vadd.f32 0.0, %v952
        %v954 = vpop.f32.mrf.mxu0
        %955 = vmatprep.mubr.f32.mxu0 0.0
        %956 = vmatmul.mubr.f32.gmra.mxu0 %v820
        %v957 = vpop.f32.mrf.mxu0
        %v958 = vadd.f32 0.0, %v957
        %v959 = vpop.f32.mrf.mxu0
        %960 = vmatprep.mubr.f32.mxu0 0.0
        %961 = vmatmul.mubr.f32.gmra.mxu0 %v823
        %v962 = vpop.f32.mrf.mxu0
        %v963 = vadd.f32 0.0, %v962
        %v964 = vpop.f32.mrf.mxu0
        %965 = vmatprep.mubr.f32.mxu0 0.0
        %966 = vmatmul.mubr.f32.gmra.mxu0 %v826
        %v967 = vpop.f32.mrf.mxu0
        %v968 = vadd.f32 0.0, %v967
        %v969 = vpop.f32.mrf.mxu0
        %970 = vmatprep.mubr.f32.mxu0 0.0
        %971 = vmatmul.mubr.f32.gmra.mxu0 %v829
        %v972 = vpop.f32.mrf.mxu0
        %v973 = vadd.f32 0.0, %v972
        %v974 = vpop.f32.mrf.mxu0
        %975 = vdwg.mxu0
        %v976 = vmax.f32 %v898, %v918
        %v977 = vmax.f32 %v903, %v923
        %v978 = vmax.f32 %v908, %v928
        %v979 = vmax.f32 %v913, %v933
        %v980 = vmax.f32 %v976, %v938
        %v981 = vmax.f32 %v977, %v943
        %v982 = vmax.f32 %v978, %v948
        %v983 = vmax.f32 %v979, %v953
        %v984 = vmax.f32 %v980, %v958
        %v985 = vmax.f32 %v981, %v963
        %v986 = vmax.f32 %v982, %v968
        %v987 = vmax.f32 %v983, %v973
        %v988 = vmax.f32 %v984, %v985
        %v989 = vmax.f32 %v986, %v987
        %v990 = vmax.f32 %v988, %v989
        %v991 = vrot.slane %v990, 4
        %v992 = vmax.f32 %v990, %v991
        %v993 = vrot.slane %v992, 2
        %v994 = vmax.f32 %v992, %v993
        %v995 = vrot.slane %v994, 1
        %v996 = vmax.f32 %v994, %v995
        %v997 = vsub.f32 %v898, %v996
        %v998 = vsub.f32 %v903, %v996
        %v999 = vsub.f32 %v908, %v996
        %v1000 = vsub.f32 %v913, %v996
        %v1001 = vsub.f32 %v918, %v996
        %v1002 = vsub.f32 %v923, %v996
        %v1003 = vsub.f32 %v928, %v996
        %v1004 = vsub.f32 %v933, %v996
        %v1005 = vsub.f32 %v938, %v996
        %v1006 = vsub.f32 %v943, %v996
        %v1007 = vsub.f32 %v948, %v996
        %v1008 = vsub.f32 %v953, %v996
        %v1009 = vsub.f32 %v958, %v996
        %v1010 = vsub.f32 %v963, %v996
        %v1011 = vsub.f32 %v968, %v996
        %v1012 = vsub.f32 %v973, %v996
        %v1013 = vmul.f32 %v997, 1.442695
        %v1014 = vpow.pop %v1013
        %v1015 = vmul.f32 %v998, 1.442695
        %v1016 = vpow.pop %v1015
        %v1017 = vmul.f32 %v999, 1.442695
        %v1018 = vpow.pop %v1017
        %v1019 = vmul.f32 %v1000, 1.442695
        %v1020 = vpow.pop %v1019
        %v1021 = vmul.f32 %v1001, 1.442695
        %v1022 = vpow.pop %v1021
        %v1023 = vmul.f32 %v1002, 1.442695
        %v1024 = vpow.pop %v1023
        %v1025 = vmul.f32 %v1003, 1.442695
        %v1026 = vpow.pop %v1025
        %v1027 = vmul.f32 %v1004, 1.442695
        %v1028 = vpow.pop %v1027
        %v1029 = vmul.f32 %v1005, 1.442695
        %v1030 = vpow.pop %v1029
        %v1031 = vmul.f32 %v1006, 1.442695
        %v1032 = vpow.pop %v1031
        %v1033 = vmul.f32 %v1007, 1.442695
        %v1034 = vpow.pop %v1033
        %v1035 = vmul.f32 %v1008, 1.442695
        %v1036 = vpow.pop %v1035
        %v1037 = vmul.f32 %v1009, 1.442695
        %v1038 = vpow.pop %v1037
        %v1039 = vmul.f32 %v1010, 1.442695
        %v1040 = vpow.pop %v1039
        %v1041 = vmul.f32 %v1011, 1.442695
        %v1042 = vpow.pop %v1041
        %v1043 = vmul.f32 %v1012, 1.442695
        %v1044 = vpow.pop %v1043
        %v1045 = vadd.f32 %v1014, %v1016
        %v1046 = vadd.f32 %v1045, %v1018
        %v1047 = vadd.f32 %v1046, %v1020
        %v1048 = vadd.f32 %v1047, %v1022
        %v1049 = vadd.f32 %v1048, %v1024
        %v1050 = vadd.f32 %v1049, %v1026
        %v1051 = vadd.f32 %v1050, %v1028
        %v1052 = vadd.f32 %v1051, %v1030
        %v1053 = vadd.f32 %v1052, %v1032
        %v1054 = vadd.f32 %v1053, %v1034
        %v1055 = vadd.f32 %v1054, %v1036
        %v1056 = vadd.f32 %v1055, %v1038
        %v1057 = vadd.f32 %v1056, %v1040
        %v1058 = vadd.f32 %v1057, %v1042
        %v1059 = vadd.f32 %v1058, %v1044
        %v1060 = vrot.slane %v1059, 4
        %v1061 = vadd.f32 %v1059, %v1060
        %v1062 = vrot.slane %v1061, 2
        %v1063 = vadd.f32 %v1061, %v1062
        %v1064 = vrot.slane %v1063, 1
        %v1065 = vadd.f32 %v1063, %v1064
        %v1066 = vrcp.pop %v1065
        %v1067 = vmul.f32 %v1014, %v1066
        %v1068 = vmul.f32 %v1016, %v1066
        %v1069 = vmul.f32 %v1018, %v1066
        %v1070 = vmul.f32 %v1020, %v1066
        %v1071 = vmul.f32 %v1022, %v1066
        %v1072 = vmul.f32 %v1024, %v1066
        %v1073 = vmul.f32 %v1026, %v1066
        %v1074 = vmul.f32 %v1028, %v1066
        %v1075 = vmul.f32 %v1030, %v1066
        %v1076 = vmul.f32 %v1032, %v1066
        %v1077 = vmul.f32 %v1034, %v1066
        %v1078 = vmul.f32 %v1036, %v1066
        %v1079 = vmul.f32 %v1038, %v1066
        %v1080 = vmul.f32 %v1040, %v1066
        %v1081 = vmul.f32 %v1042, %v1066
        %v1082 = vmul.f32 %v1044, %v1066
        %1083 = vmatprep.subr.mxu0 0.0
        %1084 = vmatpush1.msra.mxu0 %v1082
        %1085 = vmatprep.subr.mxu0 0.0
        %1086 = vmatpush1.msra.mxu0 %v1081
        %1087 = vmatprep.subr.mxu0 0.0
        %1088 = vmatpush1.msra.mxu0 %v1080
        %1089 = vmatprep.subr.mxu0 0.0
        %1090 = vmatpush1.msra.mxu0 %v1079
        %1091 = vmatprep.subr.mxu0 0.0
        %1092 = vmatpush1.msra.mxu0 %v1078
        %1093 = vmatprep.subr.mxu0 0.0
        %1094 = vmatpush1.msra.mxu0 %v1077
        %1095 = vmatprep.subr.mxu0 0.0
        %1096 = vmatpush1.msra.mxu0 %v1076
        %1097 = vmatprep.subr.mxu0 0.0
        %1098 = vmatpush1.msra.mxu0 %v1075
        %1099 = vmatprep.subr.mxu0 0.0
        %1100 = vmatpush1.msra.mxu0 %v1074
        %1101 = vmatprep.subr.mxu0 0.0
        %1102 = vmatpush1.msra.mxu0 %v1073
        %1103 = vmatprep.subr.mxu0 0.0
        %1104 = vmatpush1.msra.mxu0 %v1072
        %1105 = vmatprep.subr.mxu0 0.0
        %1106 = vmatpush1.msra.mxu0 %v1071
        %1107 = vmatprep.subr.mxu0 0.0
        %1108 = vmatpush1.msra.mxu0 %v1070
        %1109 = vmatprep.subr.mxu0 0.0
        %1110 = vmatpush1.msra.mxu0 %v1069
        %1111 = vmatprep.subr.mxu0 0.0
        %1112 = vmatpush1.msra.mxu0 %v1068
        %1113 = vmatprep.subr.mxu0 0.0
        %1114 = vmatpush1.msra.mxu0 %v1067
        %1115 = vmatprep.subr.mxu0 0.0
        %1116 = vmatpush2.msra.mxu0 0.0
        %1117 = vmatprep.subr.mxu0 0.0
        %1118 = vmatpush2.msra.mxu0 0.0
        %1119 = vmatprep.subr.mxu0 0.0
        %1120 = vmatpush2.msra.mxu0 0.0
        %1121 = vmatprep.subr.mxu0 0.0
        %1122 = vmatpush2.msra.mxu0 0.0
        %1123 = vmatprep.subr.mxu0 0.0
        %1124 = vmatpush2.msra.mxu0 0.0
        %1125 = vmatprep.subr.mxu0 0.0
        %1126 = vmatpush2.msra.mxu0 0.0
        %1127 = vmatprep.subr.mxu0 0.0
        %1128 = vmatpush2.msra.mxu0 0.0
        %1129 = vmatprep.subr.mxu0 0.0
        %1130 = vmatpush2.msra.mxu0 0.0
        %1131 = vmatprep.subr.mxu0 0.0
        %1132 = vmatpush2.msra.mxu0 0.0
        %1133 = vmatprep.subr.mxu0 0.0
        %1134 = vmatpush2.msra.mxu0 0.0
        %1135 = vmatprep.subr.mxu0 0.0
        %1136 = vmatpush2.msra.mxu0 0.0
        %1137 = vmatprep.subr.mxu0 0.0
        %1138 = vmatpush2.msra.mxu0 0.0
        %1139 = vmatprep.subr.mxu0 0.0
        %1140 = vmatpush2.msra.mxu0 0.0
        %1141 = vmatprep.subr.mxu0 0.0
        %1142 = vmatpush2.msra.mxu0 0.0
        %1143 = vmatprep.subr.mxu0 0.0
        %1144 = vmatpush2.msra.mxu0 0.0
        %1145 = vmatprep.subr.mxu0 0.0
        %1146 = vmatpush2.msra.mxu0 0.0
        %1147 = vmatprep.mubr.f32.mxu0 0.0
        %1148 = vmatmul.mubr.f32.gmra.mxu0 %v712
        %v1149 = vpop.f32.mrf.mxu0
        %v1150 = vadd.f32 0.0, %v1149
        %v1151 = vpop.f32.mrf.mxu0
        %1152 = vmatprep.mubr.f32.mxu0 0.0
        %1153 = vmatmul.mubr.f32.gmra.mxu0 %v717
        %v1154 = vpop.f32.mrf.mxu0
        %v1155 = vadd.f32 0.0, %v1154
        %v1156 = vpop.f32.mrf.mxu0
        %1157 = vmatprep.mubr.f32.mxu0 0.0
        %1158 = vmatmul.mubr.f32.gmra.mxu0 %v722
        %v1159 = vpop.f32.mrf.mxu0
        %v1160 = vadd.f32 0.0, %v1159
        %v1161 = vpop.f32.mrf.mxu0
        %1162 = vmatprep.mubr.f32.mxu0 0.0
        %1163 = vmatmul.mubr.f32.gmra.mxu0 %v727
        %v1164 = vpop.f32.mrf.mxu0
        %v1165 = vadd.f32 0.0, %v1164
        %v1166 = vpop.f32.mrf.mxu0
        %1167 = vmatprep.mubr.f32.mxu0 0.0
        %1168 = vmatmul.mubr.f32.gmra.mxu0 %v732
        %v1169 = vpop.f32.mrf.mxu0
        %v1170 = vadd.f32 0.0, %v1169
        %v1171 = vpop.f32.mrf.mxu0
        %1172 = vmatprep.mubr.f32.mxu0 0.0
        %1173 = vmatmul.mubr.f32.gmra.mxu0 %v737
        %v1174 = vpop.f32.mrf.mxu0
        %v1175 = vadd.f32 0.0, %v1174
        %v1176 = vpop.f32.mrf.mxu0
        %1177 = vmatprep.mubr.f32.mxu0 0.0
        %1178 = vmatmul.mubr.f32.gmra.mxu0 %v742
        %v1179 = vpop.f32.mrf.mxu0
        %v1180 = vadd.f32 0.0, %v1179
        %v1181 = vpop.f32.mrf.mxu0
        %1182 = vmatprep.mubr.f32.mxu0 0.0
        %1183 = vmatmul.mubr.f32.gmra.mxu0 %v747
        %v1184 = vpop.f32.mrf.mxu0
        %v1185 = vadd.f32 0.0, %v1184
        %v1186 = vpop.f32.mrf.mxu0
        %1187 = vdwg.mxu0
        %v1188 = vld [vmem:[#allocation2] sm:$0x1]
        %v1190 = vlaneseq
        %v1191 = vshrl.u32 %v1190, 7
        %v1192 = vsub.s32 0, %v1191
        %v1193 = vrot.slane %v1188, %v1192
        %1194 = vset.pattern.permute.xlu0 0
        %1195 = vperm.xlu0 %1194, %v1193
        %v1196 = vpop.permute.xlu0 %1195
        %v1198 = vmul.f32 %v1196, %v1150
        %v1199 = vmul.f32 %v1196, %v1155
        %v1200 = vmul.f32 %v1196, %v1160
        %v1201 = vmul.f32 %v1196, %v1165
        %v1202 = vmul.f32 %v1196, %v1170
        %v1203 = vmul.f32 %v1196, %v1175
        %v1204 = vmul.f32 %v1196, %v1180
        %v1205 = vmul.f32 %v1196, %v1185
        %v1206 = vadd.f32 %v1198, %v326
        %v1207 = vadd.f32 %v1199, %v327
        %v1208 = vadd.f32 %v1200, %v328
        %v1209 = vadd.f32 %v1201, %v329
        %v1210 = vadd.f32 %v1202, %v330
        %v1211 = vadd.f32 %v1203, %v331
        %v1212 = vadd.f32 %v1204, %v332
        %v1213 = vadd.f32 %v1205, %v333
        %1214 = vst [vmem:[%s325] sm:$0xff] %v1206
        %1215 = vst [vmem:[%s325 + $0x8] sm:$0xff] %v1207
        %1216 = vst [vmem:[%s325 + $0x10] sm:$0xff] %v1208
        %1217 = vst [vmem:[%s325 + $0x18] sm:$0xff] %v1209
        %1218 = vst [vmem:[%s325 + $0x20] sm:$0xff] %v1210
        %1219 = vst [vmem:[%s325 + $0x28] sm:$0xff] %v1211
        %1220 = vst [vmem:[%s325 + $0x30] sm:$0xff] %v1212
        %1221 = vst [vmem:[%s325 + $0x38] sm:$0xff] %v1213
        %s1222 = sand.u32 %s208, 1
        %s1223 = scalar_lea.sflag [#allocation5], %s1222
        %s1224 = sand.u32 %s208, 1
        %s1225 = smul.addr %s1224, 64
        %s1226 = scalar_lea.vmem [#allocation6], %s1225
        // Predicated region
        $region57: #{tpu_custom_call.1} parent=51 // pred_check
          %p1227 = pneg %p218
        $region58: #{tpu_custom_call.1} parent=51 // pred_check_branch
          %1229 = sbr.rel (%p1227) target = $region60
        $region59: #{tpu_custom_call.1} parent=51 // pred_region
          %s1231 = ssub.s32 1024, 1024
          %1232 = vsyncadd %s1223, %s1231
          %s1233 = smul.addr %s27, 8
          %s1234 = smul.addr %s1233, 128
          %s1235 = scalar_lea.hbm %s8, %s1234
          %s1236 = sshll.u32 %s1226, 4
          %s1237 = int_to_ptr.vmem [resolvable:$true] %s1236
          %1242 = dma.vmem_to_hbm [thread:$0]  %s1237, 1024, %s1235, %s1223, 128, 128, 8
        $region60: #{tpu_custom_call.1} parent=51 // pred_fallthru
          _
      $region52: #{tpu_custom_call.1} parent=5 // pred_fallthru
        _
      %p1243 = scmp.le.s32.totalorder 2, %s22
      // Predicated region
      $region61: #{tpu_custom_call.1} parent=5 // pred_check
        %p1244 = pneg %p1243
      $region62: #{tpu_custom_call.1} parent=5 // pred_check_branch
        %1246 = sbr.rel (%p1244) target = $region64
      $region63: #{tpu_custom_call.1} parent=5 // pred_region
        %s1247 = ssub.s32 %s22, 2
        // Predicated region
        $region65: #{tpu_custom_call.1} parent=63 // pred_check
          %p1248 = pneg %p224
        $region66: #{tpu_custom_call.1} parent=63 // pred_check_branch
          %1250 = sbr.rel (%p1248) target = $region68
        $region67: #{tpu_custom_call.1} parent=63 // pred_region
          %s1251 = sand.u32 %s209, 1
          %s1252 = scalar_lea.sflag [#allocation5], %s1251
          %s1253 = sand.u32 %s209, 1
          %s1254 = smul.addr %s1253, 64
          %s1255 = scalar_lea.vmem [#allocation6], %s1254
          %1256 = dma.done %s1252, 1024
        $region68: #{tpu_custom_call.1} parent=63 // pred_fallthru
          _
      $region64: #{tpu_custom_call.1} parent=5 // pred_fallthru
        _
    $region6: #{tpu_custom_call.1} parent=1 // loop_footer
      %s26 = sadd.s32 1, %s22
    $region7: #{tpu_custom_call.1} parent=1 // loop_footer_branch
      %21 = sbr.rel target = $region3
    $region8: #{tpu_custom_call.1} parent=1 // loop_exit
      _
    %1257 = vsyncpa [#allocation4], 1
    %s1258 = scalar_lea.sflag [#allocation4], 1
    %1259 = vsyncpa %s1258, 1
    %1260 = vsyncpa [#allocation5], 1
    %s1261 = scalar_lea.sflag [#allocation5], 1
    %1262 = vsyncpa %s1261, 1

</llo_original>
